<compile_context>
chip_gen: v7x
topology: tpu7x:2x2x1
jax: 0.10.0
libtpu: 0.0.40
codegen_flags: <defaults>
</compile_context>

<pallas_src>
import jax
import jax.numpy as jnp
from jax.experimental import pallas as pl
from jax.experimental.pallas import tpu as pltpu


def _bmm_kernel(att_ref, y_ref, o_ref):
    """out[b] = att[b] @ y[b] for a block of TB batches. o_ref: (TB, M, D)."""
    acc = jnp.einsum(
        "bmn,bnd->bmd", att_ref[...], y_ref[...],
        preferred_element_type=jnp.float32)
    o_ref[...] = acc.astype(o_ref.dtype)


def _bmm_kernel_flat(att_ref, y_ref, o_ref):
    """Same as _bmm_kernel, but stores a lane-dense (TB, M*D) slab."""
    acc = jnp.einsum(
        "bmn,bnd->bmd", att_ref[...], y_ref[...],
        preferred_element_type=jnp.float32)
    tb, m, d = acc.shape
    o_ref[...] = acc.reshape(tb, m * d).astype(o_ref.dtype)


def _pick_tb(B, M, N, D, itemsize):
    """Batches per grid step: target ~4 MiB of blocks per step (double-buffered
    by the pipeline -> ~8 MiB VMEM), well under scoped VMEM on v5e/v6e/v7x."""
    per_batch = max(1, (M * N + N * D + M * D) * itemsize)
    budget = 4 * 1024 * 1024
    tb = max(1, budget // per_batch)
    # Keep >= 2 grid steps when B is large enough so the "parallel" batch axis
    # can shard across the 2 TensorCores on v7x (neutral on v5e/v6e).
    if B >= 16:
        tb = min(tb, pl.cdiv(B, 2))
    if tb >= B:
        return int(B)
    if tb >= 8:
        tb = (tb // 8) * 8  # 8-aligned sublane dim for the flat output block
    return int(tb)


def _make_call(kernel, B, M, N, D, tb, out_shape, out_block, out_index_map,
               out_dtype, vmem_limit):
    return pl.pallas_call(
        kernel,
        out_shape=jax.ShapeDtypeStruct(out_shape, out_dtype),
        grid_spec=pltpu.PrefetchScalarGridSpec(
            num_scalar_prefetch=0,
            grid=(pl.cdiv(B, tb),),
            in_specs=[
                # Full per-batch (M, N) / (N, D) slices; last two block dims
                # equal the full array dims so the (8,128) rule is satisfied.
                pl.BlockSpec((tb, M, N), lambda b: (b, 0, 0)),
                pl.BlockSpec((tb, N, D), lambda b: (b, 0, 0)),
            ],
            out_specs=pl.BlockSpec(out_block, out_index_map),
        ),
        compiler_params=pltpu.CompilerParams(
            dimension_semantics=("parallel",),
            vmem_limit_bytes=vmem_limit,
        ),
    )


def apply_soft_attention(y, att, *, tb=None):
    """Pallas equivalent of Apply_Soft_Attention.forward(y, att) = bmm(att, y).

    y   : (B, N, D)
    att : (B, M, N)
    returns (B, M, D), same dtype as y.
    """
    B, N, D = y.shape
    Ba, M, Na = att.shape
    assert B == Ba and N == Na, "shape mismatch between att and y"

    out_dtype = y.dtype
    itemsize = max(att.dtype.itemsize, y.dtype.itemsize)
    if tb is None:
        tb = _pick_tb(B, M, N, D, itemsize)
    tb = int(min(max(tb, 1), B))

    block_bytes = tb * (M * N + N * D + M * D) * itemsize
    # 2x double-buffered blocks + f32 accumulator + headroom; cap leaves slack
    # on v7x (64 MiB physical VMEM per TensorCore).
    vmem_limit = int(min(48 * 1024 * 1024, max(32 * 1024 * 1024, 4 * block_bytes)))

    # TODO(synk): for very large N, add a K (reduction) grid axis with an f32
    # VMEM accumulator (pl.when init on k==0 / store on k==last) instead of
    # loading full (M, N) and (N, D) slices per step.

    # Lane-dense output path: only when D itself is not a lane multiple but the
    # flattened M*D row is, and the block's sublane dim is 8-aligned (or == B).
    flat_ok = (D % 128 != 0) and ((M * D) % 128 == 0) and (tb == B or tb % 8 == 0)

    if flat_ok:
        try:
            call = _make_call(
                _bmm_kernel_flat, B, M, N, D, tb,
                out_shape=(B, M * D),
                out_block=(tb, M * D),
                out_index_map=lambda b: (b, 0),
                out_dtype=out_dtype,
                vmem_limit=vmem_limit,
            )
            out_flat = call(att, y)
            return out_flat.reshape(B, M, D)
        except Exception:
            # Mosaic rejected the in-kernel (TB, M, D) -> (TB, M*D) relayout on
            # this backend; fall back to the plain 3-D output layout below.
            pass

    call = _make_call(
        _bmm_kernel, B, M, N, D, tb,
        out_shape=(B, M, D),
        out_block=(tb, M, D),
        out_index_map=lambda b: (b, 0, 0),
        out_dtype=out_dtype,
        vmem_limit=vmem_limit,
    )
    return call(att, y)


if __name__ == "__main__":
    # Small shapes consistent with the module's forward:
    #   batch B=2, output seq M=8, input seq N=8, hidden D=32
    B, M, N, D = 2, 8, 8, 32

    key = jax.random.PRNGKey(0)
    k1, k2 = jax.random.split(key)

    y = jax.random.normal(k1, (B, N, D), dtype=jnp.float32)
    att_logits = jax.random.normal(k2, (B, M, N), dtype=jnp.float32)
    # soft attention weights (row-wise softmax), as the surrounding NISQA
    # pipeline would produce before calling Apply_Soft_Attention
    att = jax.nn.softmax(att_logits, axis=-1)

    out = apply_soft_attention(y, att)
    out = jax.block_until_ready(out)

    ref = jnp.einsum("bmn,bnd->bmd", att, y)
    assert out.shape == (B, M, D)
    assert jnp.allclose(out, ref, atol=1e-5, rtol=1e-5)

    # Secondary check: larger batch so the grid actually has multiple TB-sized
    # blocks (exercises the batched / multi-step path used in production).
    B2 = 256
    k3, k4 = jax.random.split(jax.random.PRNGKey(0), 2)
    y2 = jax.random.normal(k3, (B2, N, D), dtype=jnp.float32)
    att2 = jax.nn.softmax(jax.random.normal(k4, (B2, M, N), dtype=jnp.float32), axis=-1)
    out2 = jax.block_until_ready(apply_soft_attention(y2, att2))
    ref2 = jnp.einsum("bmn,bnd->bmd", att2, y2)
    assert out2.shape == (B2, M, D)
    assert jnp.allclose(out2, ref2, atol=1e-5, rtol=1e-5)

    print("KERNEL_OK")
</pallas_src>

<mosaic_0001>
module attributes {stable_mosaic.version = 11 : i64} {
  func.func @_bmm_kernel_flat(%arg0: i32, %arg1: memref<2x8x8xf32, #tpu.memory_space<vmem>>, %arg2: memref<2x8x32xf32, #tpu.memory_space<vmem>>, %arg3: memref<2x256xf32, #tpu.memory_space<vmem>>) attributes {dimension_semantics = [#tpu.dimension_semantics<parallel>], iteration_bounds = array<i64: 1>, scalar_prefetch = 0 : i64, scratch_operands = 0 : i64, tpu.core_type = #tpu.core_type<tc>, window_params = [{transform_indices = @transform_0, window_bounds = array<i64: 2, 8, 8>}, {transform_indices = @transform_1, window_bounds = array<i64: 2, 8, 32>}, {transform_indices = @transform_2, window_bounds = array<i64: 2, 256>}]} {
    %c0 = arith.constant 0 : index
    %c0_0 = arith.constant 0 : index
    %c0_1 = arith.constant 0 : index
    %0 = vector.load %arg1[%c0, %c0_0, %c0_1] : memref<2x8x8xf32, #tpu.memory_space<vmem>>, vector<2x8x8xf32>
    %c0_2 = arith.constant 0 : index
    %c0_3 = arith.constant 0 : index
    %c0_4 = arith.constant 0 : index
    %1 = vector.load %arg2[%c0_2, %c0_3, %c0_4] : memref<2x8x32xf32, #tpu.memory_space<vmem>>, vector<2x8x32xf32>
    "tpu.trace_start"() <{level = 10 : i32, message = "bmn,bnd->bmd"}> : () -> ()
    %cst = arith.constant dense<0.000000e+00> : vector<2x8x32xf32>
    %2 = tpu.matmul %0, %1, %cst {dimension_numbers = #tpu.dot_dimension_numbers<[2], [1], [1], [2], [0, 0, 0, 1, 1, 2], [0], [0]>} : vector<2x8x8xf32>, vector<2x8x32xf32>, vector<2x8x32xf32> -> vector<2x8x32xf32>
    "tpu.trace_stop"() : () -> ()
    %3 = vector.shape_cast %2 : vector<2x8x32xf32> to vector<2x256xf32>
    %c0_5 = arith.constant 0 : index
    %c0_6 = arith.constant 0 : index
    %4 = vector.load %arg3[%c0_5, %c0_6] : memref<2x256xf32, #tpu.memory_space<vmem>>, vector<2x256xf32>
    tpu.vector_store %arg3[%c0_5, %c0_6], %3 {strides = array<i32>} : memref<2x256xf32, #tpu.memory_space<vmem>>, vector<2x256xf32>,
    return
  }
  func.func @transform_0(%arg0: i32) -> (i32, i32, i32) {
    %c0_i32 = arith.constant 0 : i32
    %c0_i32_0 = arith.constant 0 : i32
    %c0_i32_1 = arith.constant 0 : i32
    return %arg0, %c0_i32, %c0_i32_0 : i32, i32, i32
  }
  func.func @transform_1(%arg0: i32) -> (i32, i32, i32) {
    %c0_i32 = arith.constant 0 : i32
    %c0_i32_0 = arith.constant 0 : i32
    %c0_i32_1 = arith.constant 0 : i32
    return %arg0, %c0_i32, %c0_i32_0 : i32, i32, i32
  }
  func.func @transform_2(%arg0: i32) -> (i32, i32) {
    %c0_i32 = arith.constant 0 : i32
    %c0_i32_0 = arith.constant 0 : i32
    return %arg0, %c0_i32 : i32, i32
  }
}

module attributes {stable_mosaic.version = 11 : i64} {
  func.func @_bmm_kernel(%arg0: i32, %arg1: memref<2x8x8xf32, #tpu.memory_space<vmem>>, %arg2: memref<2x8x32xf32, #tpu.memory_space<vmem>>, %arg3: memref<2x8x32xf32, #tpu.memory_space<vmem>>) attributes {dimension_semantics = [#tpu.dimension_semantics<parallel>], iteration_bounds = array<i64: 1>, scalar_prefetch = 0 : i64, scratch_operands = 0 : i64, tpu.core_type = #tpu.core_type<tc>, window_params = [{transform_indices = @transform_0, window_bounds = array<i64: 2, 8, 8>}, {transform_indices = @transform_1, window_bounds = array<i64: 2, 8, 32>}, {transform_indices = @transform_2, window_bounds = array<i64: 2, 8, 32>}]} {
    %c0 = arith.constant 0 : index
    %c0_0 = arith.constant 0 : index
    %c0_1 = arith.constant 0 : index
    %0 = vector.load %arg1[%c0, %c0_0, %c0_1] : memref<2x8x8xf32, #tpu.memory_space<vmem>>, vector<2x8x8xf32>
    %c0_2 = arith.constant 0 : index
    %c0_3 = arith.constant 0 : index
    %c0_4 = arith.constant 0 : index
    %1 = vector.load %arg2[%c0_2, %c0_3, %c0_4] : memref<2x8x32xf32, #tpu.memory_space<vmem>>, vector<2x8x32xf32>
    "tpu.trace_start"() <{level = 10 : i32, message = "bmn,bnd->bmd"}> : () -> ()
    %cst = arith.constant dense<0.000000e+00> : vector<2x8x32xf32>
    %2 = tpu.matmul %0, %1, %cst {dimension_numbers = #tpu.dot_dimension_numbers<[2], [1], [1], [2], [0, 0, 0, 1, 1, 2], [0], [0]>} : vector<2x8x8xf32>, vector<2x8x32xf32>, vector<2x8x32xf32> -> vector<2x8x32xf32>
    "tpu.trace_stop"() : () -> ()
    %c0_5 = arith.constant 0 : index
    %c0_6 = arith.constant 0 : index
    %c0_7 = arith.constant 0 : index
    %3 = vector.load %arg3[%c0_5, %c0_6, %c0_7] : memref<2x8x32xf32, #tpu.memory_space<vmem>>, vector<2x8x32xf32>
    tpu.vector_store %arg3[%c0_5, %c0_6, %c0_7], %2 {strides = array<i32>} : memref<2x8x32xf32, #tpu.memory_space<vmem>>, vector<2x8x32xf32>,
    return
  }
  func.func @transform_0(%arg0: i32) -> (i32, i32, i32) {
    %c0_i32 = arith.constant 0 : i32
    %c0_i32_0 = arith.constant 0 : i32
    %c0_i32_1 = arith.constant 0 : i32
    return %arg0, %c0_i32, %c0_i32_0 : i32, i32, i32
  }
  func.func @transform_1(%arg0: i32) -> (i32, i32, i32) {
    %c0_i32 = arith.constant 0 : i32
    %c0_i32_0 = arith.constant 0 : i32
    %c0_i32_1 = arith.constant 0 : i32
    return %arg0, %c0_i32, %c0_i32_0 : i32, i32, i32
  }
  func.func @transform_2(%arg0: i32) -> (i32, i32, i32) {
    %c0_i32 = arith.constant 0 : i32
    %c0_i32_0 = arith.constant 0 : i32
    %c0_i32_1 = arith.constant 0 : i32
    return %arg0, %c0_i32, %c0_i32_0 : i32, i32, i32
  }
}

</mosaic_0001>

<llo_original>
// kernel: tpu_custom_call.1
$region0: #{tpu_custom_call.1}
  #allocation0 [shape = 'u32[]', space=smem, size = 0x4, offset = 0x4, fixed_abs, tag = 'smem constant byte address 0x4 - core index']
  #allocation1 [shape = 'u32[144,128]{1,0:T(1,128)}', space=vmem, size = 0x12000, scoped, tag = 'internal scratch']
  %s0 = inlined_call_operand.hbm [shape: f32[2,8,8], index: 0, kind: input, shape index: {}]
  %s1 = inlined_call_operand.hbm [shape: f32[2,8,32], index: 1, kind: input, shape index: {}]
  %s2 = inlined_call_operand.hbm [shape: f32[2,256], index: 2, kind: output, shape index: {}]
  %s3 = sld [smem:[#allocation0]]
  $region26: #{tpu_custom_call.1} parent=0
    _
  %s5 = ssub.s32 1, %s3
  %s6 = scalar_select 0, %s5, %s3
  $region1: #{tpu_custom_call.1} parent=0
    #allocation2 [shape = 'u8[8192]{0}', space=vmem, size = 0x2000, scoped, tag = 'input window, operand 0, single buffered']
    #allocation3 [shape = 's32[1]{0}', space=sflag, size = 0x4, scoped, tag = 'scoped memory for tpu_custom_call.1']
    #allocation4 [shape = 's32[1]{0}', space=sflag, size = 0x4, scoped, tag = 'scoped memory for tpu_custom_call.1']
    #allocation5 [shape = 'u8[8192]{0}', space=vmem, size = 0x2000, scoped, tag = 'input window, operand 1, single buffered']
    #allocation6 [shape = 's32[1]{0}', space=sflag, size = 0x4, scoped, tag = 'scoped memory for tpu_custom_call.1']
    #allocation7 [shape = 'u8[2048]{0}', space=vmem, size = 0x800, scoped, tag = 'output window, operand 0, single buffered']
    %7 = vsyncpa [#allocation3], 0
    %8 = vsyncpa [#allocation6], 0
    %9 = vsyncpa [#allocation4], 0
    // Predicated region
    $region2: #{tpu_custom_call.1} parent=1 // pred_check
      _
    $region3: #{tpu_custom_call.1} parent=1 // pred_check_branch
      %11 = sbr.rel (0) target = $region5
    $region4: #{tpu_custom_call.1} parent=1 // pred_region
      %s13 = ssub.s32 256, 256
      %14 = vsyncadd [#allocation3], %s13
      %s15 = sshll.u32 [#allocation2], 4
      %s16 = int_to_ptr.vmem [resolvable:$true] %s15
      %21 = dma.hbm_to_vmem [thread:$0]  %s0, 256, %s16, [#allocation3], 128, 128, 8
    $region5: #{tpu_custom_call.1} parent=1 // pred_fallthru
      _
    // Predicated region
    $region6: #{tpu_custom_call.1} parent=1 // pred_check
      _
    $region7: #{tpu_custom_call.1} parent=1 // pred_check_branch
      %23 = sbr.rel (0) target = $region9
    $region8: #{tpu_custom_call.1} parent=1 // pred_region
      %s25 = ssub.s32 256, 256
      %26 = vsyncadd [#allocation6], %s25
      %s27 = sshll.u32 [#allocation5], 4
      %s28 = int_to_ptr.vmem [resolvable:$true] %s27
      %33 = dma.hbm_to_vmem [thread:$0]  %s1, 256, %s28, [#allocation6], 128, 128, 8
    $region9: #{tpu_custom_call.1} parent=1 // pred_fallthru
      _
    // Predicated region
    $region10: #{tpu_custom_call.1} parent=1 // pred_check
      _
    $region11: #{tpu_custom_call.1} parent=1 // pred_check_branch
      %35 = sbr.rel (0) target = $region13
    $region12: #{tpu_custom_call.1} parent=1 // pred_region
      %36 = dma.done [#allocation3], 256
    $region13: #{tpu_custom_call.1} parent=1 // pred_fallthru
      _
    // Predicated region
    $region14: #{tpu_custom_call.1} parent=1 // pred_check
      _
    $region15: #{tpu_custom_call.1} parent=1 // pred_check_branch
      %38 = sbr.rel (0) target = $region17
    $region16: #{tpu_custom_call.1} parent=1 // pred_region
      %39 = dma.done [#allocation6], 256
    $region17: #{tpu_custom_call.1} parent=1 // pred_fallthru
      _
    %v40 = vld [vmem:[#allocation2] sm:$0xff]
    %v41 = vld [vmem:[#allocation2 + $0x8] sm:$0xff]
    %v42 = vld [vmem:[#allocation5] sm:$0xff]
    %v43 = vld [vmem:[#allocation5 + $0x8] sm:$0xff]
    %vm44 = vcmask 64512
    %v46 = vsel %vm44, %v40, 0
    %48 = vmatprep.subr.mxu0 0.0
    %49 = vmatpush1.msra.mxu0 %v42
    %50 = vmatprep.subr.mxu0 0.0
    %51 = vmatpush1.msra.mxu0 0.0
    %52 = vmatprep.subr.mxu0 0.0
    %53 = vmatpush1.msra.mxu0 0.0
    %54 = vmatprep.subr.mxu0 0.0
    %55 = vmatpush1.msra.mxu0 0.0
    %56 = vmatprep.subr.mxu0 0.0
    %57 = vmatpush1.msra.mxu0 0.0
    %58 = vmatprep.subr.mxu0 0.0
    %59 = vmatpush1.msra.mxu0 0.0
    %60 = vmatprep.subr.mxu0 0.0
    %61 = vmatpush1.msra.mxu0 0.0
    %62 = vmatprep.subr.mxu0 0.0
    %63 = vmatpush1.msra.mxu0 0.0
    %64 = vmatprep.subr.mxu0 0.0
    %65 = vmatpush1.msra.mxu0 0.0
    %66 = vmatprep.subr.mxu0 0.0
    %67 = vmatpush1.msra.mxu0 0.0
    %68 = vmatprep.subr.mxu0 0.0
    %69 = vmatpush1.msra.mxu0 0.0
    %70 = vmatprep.subr.mxu0 0.0
    %71 = vmatpush1.msra.mxu0 0.0
    %72 = vmatprep.subr.mxu0 0.0
    %73 = vmatpush1.msra.mxu0 0.0
    %74 = vmatprep.subr.mxu0 0.0
    %75 = vmatpush1.msra.mxu0 0.0
    %76 = vmatprep.subr.mxu0 0.0
    %77 = vmatpush1.msra.mxu0 0.0
    %78 = vmatprep.subr.mxu0 0.0
    %79 = vmatpush1.msra.mxu0 0.0
    %80 = vmatprep.subr.mxu0 0.0
    %81 = vmatpush1.msra.mxu0 0.0
    %82 = vmatprep.subr.mxu0 0.0
    %83 = vmatpush1.msra.mxu0 0.0
    %84 = vmatprep.subr.mxu0 0.0
    %85 = vmatpush1.msra.mxu0 0.0
    %86 = vmatprep.subr.mxu0 0.0
    %87 = vmatpush1.msra.mxu0 0.0
    %88 = vmatprep.subr.mxu0 0.0
    %89 = vmatpush1.msra.mxu0 0.0
    %90 = vmatprep.subr.mxu0 0.0
    %91 = vmatpush1.msra.mxu0 0.0
    %92 = vmatprep.subr.mxu0 0.0
    %93 = vmatpush1.msra.mxu0 0.0
    %94 = vmatprep.subr.mxu0 0.0
    %95 = vmatpush1.msra.mxu0 0.0
    %96 = vmatprep.subr.mxu0 0.0
    %97 = vmatpush1.msra.mxu0 0.0
    %98 = vmatprep.subr.mxu0 0.0
    %99 = vmatpush1.msra.mxu0 0.0
    %100 = vmatprep.subr.mxu0 0.0
    %101 = vmatpush1.msra.mxu0 0.0
    %102 = vmatprep.subr.mxu0 0.0
    %103 = vmatpush1.msra.mxu0 0.0
    %104 = vmatprep.subr.mxu0 0.0
    %105 = vmatpush1.msra.mxu0 0.0
    %106 = vmatprep.subr.mxu0 0.0
    %107 = vmatpush1.msra.mxu0 0.0
    %108 = vmatprep.subr.mxu0 0.0
    %109 = vmatpush1.msra.mxu0 0.0
    %110 = vmatprep.subr.mxu0 0.0
    %111 = vmatpush1.msra.mxu0 0.0
    %112 = vmatprep.mubr.f32.mxu0 0.0
    %113 = vmatmul.mubr.f32.gmra.mrb[0].mxu0 %v46
    %v114 = vpop.f32.mrb[0].mxu0
    %v115 = vadd.f32 0.0, %v114
    %v116 = vpop.f32.mrb[0].mxu0
    %117 = vdwg.mxu0
    %v119 = vsel %vm44, %v41, 0
    %121 = vmatprep.subr.mxu0 0.0
    %122 = vmatpush1.msra.mxu0 %v43
    %123 = vmatprep.subr.mxu0 0.0
    %124 = vmatpush1.msra.mxu0 0.0
    %125 = vmatprep.subr.mxu0 0.0
    %126 = vmatpush1.msra.mxu0 0.0
    %127 = vmatprep.subr.mxu0 0.0
    %128 = vmatpush1.msra.mxu0 0.0
    %129 = vmatprep.subr.mxu0 0.0
    %130 = vmatpush1.msra.mxu0 0.0
    %131 = vmatprep.subr.mxu0 0.0
    %132 = vmatpush1.msra.mxu0 0.0
    %133 = vmatprep.subr.mxu0 0.0
    %134 = vmatpush1.msra.mxu0 0.0
    %135 = vmatprep.subr.mxu0 0.0
    %136 = vmatpush1.msra.mxu0 0.0
    %137 = vmatprep.subr.mxu0 0.0
    %138 = vmatpush1.msra.mxu0 0.0
    %139 = vmatprep.subr.mxu0 0.0
    %140 = vmatpush1.msra.mxu0 0.0
    %141 = vmatprep.subr.mxu0 0.0
    %142 = vmatpush1.msra.mxu0 0.0
    %143 = vmatprep.subr.mxu0 0.0
    %144 = vmatpush1.msra.mxu0 0.0
    %145 = vmatprep.subr.mxu0 0.0
    %146 = vmatpush1.msra.mxu0 0.0
    %147 = vmatprep.subr.mxu0 0.0
    %148 = vmatpush1.msra.mxu0 0.0
    %149 = vmatprep.subr.mxu0 0.0
    %150 = vmatpush1.msra.mxu0 0.0
    %151 = vmatprep.subr.mxu0 0.0
    %152 = vmatpush1.msra.mxu0 0.0
    %153 = vmatprep.subr.mxu0 0.0
    %154 = vmatpush1.msra.mxu0 0.0
    %155 = vmatprep.subr.mxu0 0.0
    %156 = vmatpush1.msra.mxu0 0.0
    %157 = vmatprep.subr.mxu0 0.0
    %158 = vmatpush1.msra.mxu0 0.0
    %159 = vmatprep.subr.mxu0 0.0
    %160 = vmatpush1.msra.mxu0 0.0
    %161 = vmatprep.subr.mxu0 0.0
    %162 = vmatpush1.msra.mxu0 0.0
    %163 = vmatprep.subr.mxu0 0.0
    %164 = vmatpush1.msra.mxu0 0.0
    %165 = vmatprep.subr.mxu0 0.0
    %166 = vmatpush1.msra.mxu0 0.0
    %167 = vmatprep.subr.mxu0 0.0
    %168 = vmatpush1.msra.mxu0 0.0
    %169 = vmatprep.subr.mxu0 0.0
    %170 = vmatpush1.msra.mxu0 0.0
    %171 = vmatprep.subr.mxu0 0.0
    %172 = vmatpush1.msra.mxu0 0.0
    %173 = vmatprep.subr.mxu0 0.0
    %174 = vmatpush1.msra.mxu0 0.0
    %175 = vmatprep.subr.mxu0 0.0
    %176 = vmatpush1.msra.mxu0 0.0
    %177 = vmatprep.subr.mxu0 0.0
    %178 = vmatpush1.msra.mxu0 0.0
    %179 = vmatprep.subr.mxu0 0.0
    %180 = vmatpush1.msra.mxu0 0.0
    %181 = vmatprep.subr.mxu0 0.0
    %182 = vmatpush1.msra.mxu0 0.0
    %183 = vmatprep.subr.mxu0 0.0
    %184 = vmatpush1.msra.mxu0 0.0
    %185 = vmatprep.mubr.f32.mxu0 0.0
    %186 = vmatmul.mubr.f32.gmra.mrb[0].mxu0 %v119
    %v187 = vpop.f32.mrb[0].mxu0
    %v188 = vadd.f32 0.0, %v187
    %v189 = vpop.f32.mrb[0].mxu0
    %190 = vdwg.mxu0
    %v191 = vcombine.high %v115, 0.0
    %v193 = vunpack.c.l.s4 1983009808
    %v194 = vunpack.c.0.s8 %v193
    %v195 = vlaneseq
    %v196 = vshrl.u32 %v195, 7
    %v197 = vsub.s32 %v194, %v196
    %v198 = vrot.slane %v115, %v197
    %v200 = vunpack.c.l.s4 1983009808
    %v201 = vunpack.c.0.s8 %v200
    %v202 = vlaneseq
    %v203 = vshrl.u32 %v202, 7
    %v204 = vsub.s32 %v201, %v203
    %v205 = vrot.slane %v191, %v204
    %v206 = vcombine.high %v188, 0.0
    %v208 = vunpack.c.l.s4 1983009808
    %v209 = vunpack.c.0.s8 %v208
    %v210 = vlaneseq
    %v211 = vshrl.u32 %v210, 7
    %v212 = vsub.s32 %v209, %v211
    %v213 = vrot.slane %v188, %v212
    %v215 = vunpack.c.l.s4 1983009808
    %v216 = vunpack.c.0.s8 %v215
    %v217 = vlaneseq
    %v218 = vshrl.u32 %v217, 7
    %v219 = vsub.s32 %v216, %v218
    %v220 = vrot.slane %v206, %v219
    %v221 = vcombine.low %v198, %v213
    %v222 = vcombine.high %v198, %v213
    %v224 = vunpack.c.l.s4 1934713408
    %v225 = vunpack.c.0.s8 %v224
    %v226 = vlaneseq
    %v227 = vshrl.u32 %v226, 7
    %v228 = vsub.s32 %v225, %v227
    %v229 = vrot.slane %v221, %v228
    %v231 = vunpack.c.l.s4 1934713408
    %v232 = vunpack.c.0.s8 %v231
    %v233 = vlaneseq
    %v234 = vshrl.u32 %v233, 7
    %v235 = vsub.s32 %v232, %v234
    %v236 = vrot.slane %v222, %v235
    %v237 = vcombine.low %v205, %v220
    %v238 = vcombine.high %v205, %v220
    %v240 = vunpack.c.l.s4 1934713408
    %v241 = vunpack.c.0.s8 %v240
    %v242 = vlaneseq
    %v243 = vshrl.u32 %v242, 7
    %v244 = vsub.s32 %v241, %v243
    %v245 = vrot.slane %v237, %v244
    %v247 = vunpack.c.l.s4 1934713408
    %v248 = vunpack.c.0.s8 %v247
    %v249 = vlaneseq
    %v250 = vshrl.u32 %v249, 7
    %v251 = vsub.s32 %v248, %v250
    %v252 = vrot.slane %v238, %v251
    %v253 = vcombine.high %v229, 0.0
    %v254 = vcombine.high %v236, 0.0
    %v255 = vcombine.high %v245, 0.0
    %v256 = vcombine.high %v252, 0.0
    %258 = vrot.lane.b32.xlu0 %v253, 32
    %v259 = vpop.permute.xlu0 %258
    %262 = vrot.lane.b32.xlu0 %v236, 64
    %v263 = vpop.permute.xlu0 %262
    %266 = vrot.lane.b32.xlu0 %v254, 96
    %v267 = vpop.permute.xlu0 %266
    %270 = vrot.lane.b32.xlu0 %v255, 32
    %v271 = vpop.permute.xlu0 %270
    %274 = vrot.lane.b32.xlu0 %v252, 64
    %v275 = vpop.permute.xlu0 %274
    %278 = vrot.lane.b32.xlu0 %v256, 96
    %v279 = vpop.permute.xlu0 %278
    %vm281 = vcmask 261120
    %v282 = vsel %vm281, %v229, %v259
    %vm283 = vcmask 523264
    %v284 = vsel %vm283, %v282, %v263
    %vm285 = vcmask 785408
    %v286 = vsel %vm285, %v284, %v267
    %v287 = vsel %vm281, %v245, %v271
    %v288 = vsel %vm283, %v287, %v275
    %v289 = vsel %vm285, %v288, %v279
    %v292 = vcombine.low %v286, %v289
    %v294 = vunpack.c.l.s4 1983009808
    %v295 = vunpack.c.0.s8 %v294
    %v296 = vlaneseq
    %v297 = vshrl.u32 %v296, 7
    %v298 = vsub.s32 %v295, %v297
    %v299 = vrot.slane %v292, %v298
    %301 = vst [vmem:[#allocation7] sm:$0xf] %v299
    // Predicated region
    $region18: #{tpu_custom_call.1} parent=1 // pred_check
      _
    $region19: #{tpu_custom_call.1} parent=1 // pred_check_branch
      %303 = sbr.rel (0) target = $region21
    $region20: #{tpu_custom_call.1} parent=1 // pred_region
      %s305 = ssub.s32 64, 64
      %306 = vsyncadd [#allocation4], %s305
      %s308 = sshll.u32 [#allocation7], 4
      %s309 = int_to_ptr.vmem [resolvable:$true] %s308
      %311 = dma.vmem_to_hbm [thread:$0]  %s309, 64, %s2, [#allocation4]
    $region21: #{tpu_custom_call.1} parent=1 // pred_fallthru
      _
    // Predicated region
    $region22: #{tpu_custom_call.1} parent=1 // pred_check
      _
    $region23: #{tpu_custom_call.1} parent=1 // pred_check_branch
      %313 = sbr.rel (0) target = $region25
    $region24: #{tpu_custom_call.1} parent=1 // pred_region
      %314 = dma.done [#allocation4], 64
    $region25: #{tpu_custom_call.1} parent=1 // pred_fallthru
      _
    %315 = vsyncpa [#allocation3], 1
    %316 = vsyncpa [#allocation6], 1
    %317 = vsyncpa [#allocation4], 1

// kernel: tpu_custom_call.1
$region0: #{tpu_custom_call.1}
  #allocation0 [shape = 'u32[]', space=smem, size = 0x4, offset = 0x4, fixed_abs, tag = 'smem constant byte address 0x4 - core index']
  #allocation1 [shape = 'u32[144,128]{1,0:T(1,128)}', space=vmem, size = 0x12000, scoped, tag = 'internal scratch']
  %s0 = inlined_call_operand.hbm [shape: f32[2,8,8], index: 0, kind: input, shape index: {}]
  %s1 = inlined_call_operand.hbm [shape: f32[2,8,32], index: 1, kind: input, shape index: {}]
  %s2 = inlined_call_operand.hbm [shape: f32[2,8,32], index: 2, kind: output, shape index: {}]
  %s3 = sld [smem:[#allocation0]]
  $region26: #{tpu_custom_call.1} parent=0
    _
  %s5 = ssub.s32 1, %s3
  %s6 = scalar_select 0, %s5, %s3
  $region1: #{tpu_custom_call.1} parent=0
    #allocation2 [shape = 'u8[8192]{0}', space=vmem, size = 0x2000, scoped, tag = 'input window, operand 0, single buffered']
    #allocation3 [shape = 's32[1]{0}', space=sflag, size = 0x4, scoped, tag = 'scoped memory for tpu_custom_call.1']
    #allocation4 [shape = 's32[1]{0}', space=sflag, size = 0x4, scoped, tag = 'scoped memory for tpu_custom_call.1']
    #allocation5 [shape = 'u8[8192]{0}', space=vmem, size = 0x2000, scoped, tag = 'input window, operand 1, single buffered']
    #allocation6 [shape = 's32[1]{0}', space=sflag, size = 0x4, scoped, tag = 'scoped memory for tpu_custom_call.1']
    #allocation7 [shape = 'u8[8192]{0}', space=vmem, size = 0x2000, scoped, tag = 'output window, operand 0, single buffered']
    %7 = vsyncpa [#allocation3], 0
    %8 = vsyncpa [#allocation6], 0
    %9 = vsyncpa [#allocation4], 0
    // Predicated region
    $region2: #{tpu_custom_call.1} parent=1 // pred_check
      _
    $region3: #{tpu_custom_call.1} parent=1 // pred_check_branch
      %11 = sbr.rel (0) target = $region5
    $region4: #{tpu_custom_call.1} parent=1 // pred_region
      %s13 = ssub.s32 256, 256
      %14 = vsyncadd [#allocation3], %s13
      %s15 = sshll.u32 [#allocation2], 4
      %s16 = int_to_ptr.vmem [resolvable:$true] %s15
      %21 = dma.hbm_to_vmem [thread:$0]  %s0, 256, %s16, [#allocation3], 128, 128, 8
    $region5: #{tpu_custom_call.1} parent=1 // pred_fallthru
      _
    // Predicated region
    $region6: #{tpu_custom_call.1} parent=1 // pred_check
      _
    $region7: #{tpu_custom_call.1} parent=1 // pred_check_branch
      %23 = sbr.rel (0) target = $region9
    $region8: #{tpu_custom_call.1} parent=1 // pred_region
      %s25 = ssub.s32 256, 256
      %26 = vsyncadd [#allocation6], %s25
      %s27 = sshll.u32 [#allocation5], 4
      %s28 = int_to_ptr.vmem [resolvable:$true] %s27
      %33 = dma.hbm_to_vmem [thread:$0]  %s1, 256, %s28, [#allocation6], 128, 128, 8
    $region9: #{tpu_custom_call.1} parent=1 // pred_fallthru
      _
    // Predicated region
    $region10: #{tpu_custom_call.1} parent=1 // pred_check
      _
    $region11: #{tpu_custom_call.1} parent=1 // pred_check_branch
      %35 = sbr.rel (0) target = $region13
    $region12: #{tpu_custom_call.1} parent=1 // pred_region
      %36 = dma.done [#allocation3], 256
    $region13: #{tpu_custom_call.1} parent=1 // pred_fallthru
      _
    // Predicated region
    $region14: #{tpu_custom_call.1} parent=1 // pred_check
      _
    $region15: #{tpu_custom_call.1} parent=1 // pred_check_branch
      %38 = sbr.rel (0) target = $region17
    $region16: #{tpu_custom_call.1} parent=1 // pred_region
      %39 = dma.done [#allocation6], 256
    $region17: #{tpu_custom_call.1} parent=1 // pred_fallthru
      _
    %v40 = vld [vmem:[#allocation2] sm:$0xff]
    %v41 = vld [vmem:[#allocation2 + $0x8] sm:$0xff]
    %v42 = vld [vmem:[#allocation5] sm:$0xff]
    %v43 = vld [vmem:[#allocation5 + $0x8] sm:$0xff]
    %vm44 = vcmask 64512
    %v46 = vsel %vm44, %v40, 0
    %48 = vmatprep.subr.mxu0 0.0
    %49 = vmatpush1.msra.mxu0 %v42
    %50 = vmatprep.subr.mxu0 0.0
    %51 = vmatpush1.msra.mxu0 0.0
    %52 = vmatprep.subr.mxu0 0.0
    %53 = vmatpush1.msra.mxu0 0.0
    %54 = vmatprep.subr.mxu0 0.0
    %55 = vmatpush1.msra.mxu0 0.0
    %56 = vmatprep.subr.mxu0 0.0
    %57 = vmatpush1.msra.mxu0 0.0
    %58 = vmatprep.subr.mxu0 0.0
    %59 = vmatpush1.msra.mxu0 0.0
    %60 = vmatprep.subr.mxu0 0.0
    %61 = vmatpush1.msra.mxu0 0.0
    %62 = vmatprep.subr.mxu0 0.0
    %63 = vmatpush1.msra.mxu0 0.0
    %64 = vmatprep.subr.mxu0 0.0
    %65 = vmatpush1.msra.mxu0 0.0
    %66 = vmatprep.subr.mxu0 0.0
    %67 = vmatpush1.msra.mxu0 0.0
    %68 = vmatprep.subr.mxu0 0.0
    %69 = vmatpush1.msra.mxu0 0.0
    %70 = vmatprep.subr.mxu0 0.0
    %71 = vmatpush1.msra.mxu0 0.0
    %72 = vmatprep.subr.mxu0 0.0
    %73 = vmatpush1.msra.mxu0 0.0
    %74 = vmatprep.subr.mxu0 0.0
    %75 = vmatpush1.msra.mxu0 0.0
    %76 = vmatprep.subr.mxu0 0.0
    %77 = vmatpush1.msra.mxu0 0.0
    %78 = vmatprep.subr.mxu0 0.0
    %79 = vmatpush1.msra.mxu0 0.0
    %80 = vmatprep.subr.mxu0 0.0
    %81 = vmatpush1.msra.mxu0 0.0
    %82 = vmatprep.subr.mxu0 0.0
    %83 = vmatpush1.msra.mxu0 0.0
    %84 = vmatprep.subr.mxu0 0.0
    %85 = vmatpush1.msra.mxu0 0.0
    %86 = vmatprep.subr.mxu0 0.0
    %87 = vmatpush1.msra.mxu0 0.0
    %88 = vmatprep.subr.mxu0 0.0
    %89 = vmatpush1.msra.mxu0 0.0
    %90 = vmatprep.subr.mxu0 0.0
    %91 = vmatpush1.msra.mxu0 0.0
    %92 = vmatprep.subr.mxu0 0.0
    %93 = vmatpush1.msra.mxu0 0.0
    %94 = vmatprep.subr.mxu0 0.0
    %95 = vmatpush1.msra.mxu0 0.0
    %96 = vmatprep.subr.mxu0 0.0
    %97 = vmatpush1.msra.mxu0 0.0
    %98 = vmatprep.subr.mxu0 0.0
    %99 = vmatpush1.msra.mxu0 0.0
    %100 = vmatprep.subr.mxu0 0.0
    %101 = vmatpush1.msra.mxu0 0.0
    %102 = vmatprep.subr.mxu0 0.0
    %103 = vmatpush1.msra.mxu0 0.0
    %104 = vmatprep.subr.mxu0 0.0
    %105 = vmatpush1.msra.mxu0 0.0
    %106 = vmatprep.subr.mxu0 0.0
    %107 = vmatpush1.msra.mxu0 0.0
    %108 = vmatprep.subr.mxu0 0.0
    %109 = vmatpush1.msra.mxu0 0.0
    %110 = vmatprep.subr.mxu0 0.0
    %111 = vmatpush1.msra.mxu0 0.0
    %112 = vmatprep.mubr.f32.mxu0 0.0
    %113 = vmatmul.mubr.f32.gmra.mrb[0].mxu0 %v46
    %v114 = vpop.f32.mrb[0].mxu0
    %v115 = vadd.f32 0.0, %v114
    %v116 = vpop.f32.mrb[0].mxu0
    %117 = vdwg.mxu0
    %v119 = vsel %vm44, %v41, 0
    %121 = vmatprep.subr.mxu0 0.0
    %122 = vmatpush1.msra.mxu0 %v43
    %123 = vmatprep.subr.mxu0 0.0
    %124 = vmatpush1.msra.mxu0 0.0
    %125 = vmatprep.subr.mxu0 0.0
    %126 = vmatpush1.msra.mxu0 0.0
    %127 = vmatprep.subr.mxu0 0.0
    %128 = vmatpush1.msra.mxu0 0.0
    %129 = vmatprep.subr.mxu0 0.0
    %130 = vmatpush1.msra.mxu0 0.0
    %131 = vmatprep.subr.mxu0 0.0
    %132 = vmatpush1.msra.mxu0 0.0
    %133 = vmatprep.subr.mxu0 0.0
    %134 = vmatpush1.msra.mxu0 0.0
    %135 = vmatprep.subr.mxu0 0.0
    %136 = vmatpush1.msra.mxu0 0.0
    %137 = vmatprep.subr.mxu0 0.0
    %138 = vmatpush1.msra.mxu0 0.0
    %139 = vmatprep.subr.mxu0 0.0
    %140 = vmatpush1.msra.mxu0 0.0
    %141 = vmatprep.subr.mxu0 0.0
    %142 = vmatpush1.msra.mxu0 0.0
    %143 = vmatprep.subr.mxu0 0.0
    %144 = vmatpush1.msra.mxu0 0.0
    %145 = vmatprep.subr.mxu0 0.0
    %146 = vmatpush1.msra.mxu0 0.0
    %147 = vmatprep.subr.mxu0 0.0
    %148 = vmatpush1.msra.mxu0 0.0
    %149 = vmatprep.subr.mxu0 0.0
    %150 = vmatpush1.msra.mxu0 0.0
    %151 = vmatprep.subr.mxu0 0.0
    %152 = vmatpush1.msra.mxu0 0.0
    %153 = vmatprep.subr.mxu0 0.0
    %154 = vmatpush1.msra.mxu0 0.0
    %155 = vmatprep.subr.mxu0 0.0
    %156 = vmatpush1.msra.mxu0 0.0
    %157 = vmatprep.subr.mxu0 0.0
    %158 = vmatpush1.msra.mxu0 0.0
    %159 = vmatprep.subr.mxu0 0.0
    %160 = vmatpush1.msra.mxu0 0.0
    %161 = vmatprep.subr.mxu0 0.0
    %162 = vmatpush1.msra.mxu0 0.0
    %163 = vmatprep.subr.mxu0 0.0
    %164 = vmatpush1.msra.mxu0 0.0
    %165 = vmatprep.subr.mxu0 0.0
    %166 = vmatpush1.msra.mxu0 0.0
    %167 = vmatprep.subr.mxu0 0.0
    %168 = vmatpush1.msra.mxu0 0.0
    %169 = vmatprep.subr.mxu0 0.0
    %170 = vmatpush1.msra.mxu0 0.0
    %171 = vmatprep.subr.mxu0 0.0
    %172 = vmatpush1.msra.mxu0 0.0
    %173 = vmatprep.subr.mxu0 0.0
    %174 = vmatpush1.msra.mxu0 0.0
    %175 = vmatprep.subr.mxu0 0.0
    %176 = vmatpush1.msra.mxu0 0.0
    %177 = vmatprep.subr.mxu0 0.0
    %178 = vmatpush1.msra.mxu0 0.0
    %179 = vmatprep.subr.mxu0 0.0
    %180 = vmatpush1.msra.mxu0 0.0
    %181 = vmatprep.subr.mxu0 0.0
    %182 = vmatpush1.msra.mxu0 0.0
    %183 = vmatprep.subr.mxu0 0.0
    %184 = vmatpush1.msra.mxu0 0.0
    %185 = vmatprep.mubr.f32.mxu0 0.0
    %186 = vmatmul.mubr.f32.gmra.mrb[0].mxu0 %v119
    %v187 = vpop.f32.mrb[0].mxu0
    %v188 = vadd.f32 0.0, %v187
    %v189 = vpop.f32.mrb[0].mxu0
    %190 = vdwg.mxu0
    %vm191 = vcmask 261120
    %192 = vst.msk [vmem:[#allocation7] sm:$0xff] %vm191, %v115
    %193 = vst.msk [vmem:[#allocation7 + $0x8] sm:$0xff] %vm191, %v188
    // Predicated region
    $region18: #{tpu_custom_call.1} parent=1 // pred_check
      _
    $region19: #{tpu_custom_call.1} parent=1 // pred_check_branch
      %195 = sbr.rel (0) target = $region21
    $region20: #{tpu_custom_call.1} parent=1 // pred_region
      %s197 = ssub.s32 256, 256
      %198 = vsyncadd [#allocation4], %s197
      %s199 = sshll.u32 [#allocation7], 4
      %s200 = int_to_ptr.vmem [resolvable:$true] %s199
      %205 = dma.vmem_to_hbm [thread:$0]  %s200, 256, %s2, [#allocation4], 128, 128, 8
    $region21: #{tpu_custom_call.1} parent=1 // pred_fallthru
      _
    // Predicated region
    $region22: #{tpu_custom_call.1} parent=1 // pred_check
      _
    $region23: #{tpu_custom_call.1} parent=1 // pred_check_branch
      %207 = sbr.rel (0) target = $region25
    $region24: #{tpu_custom_call.1} parent=1 // pred_region
      %208 = dma.done [#allocation4], 256
    $region25: #{tpu_custom_call.1} parent=1 // pred_fallthru
      _
    %209 = vsyncpa [#allocation3], 1
    %210 = vsyncpa [#allocation6], 1
    %211 = vsyncpa [#allocation4], 1

</llo_original>
